<compile_context>
chip_gen: v5e
topology: v5e:2x2
jax: 0.10.0
libtpu: 0.0.40
codegen_flags: <defaults>
</compile_context>

<pallas_src>
import functools
import math

import jax
import jax.numpy as jnp
from jax import lax
from jax.experimental import pallas as pl
from jax.experimental.pallas import tpu as pltpu

EPS = 1e-5  # nn.BatchNorm2d default eps


@functools.lru_cache(maxsize=None)
def _vmem_limit():
    """Per-generation VMEM scoped limit (<= 48 MiB, <= 5/8 of physical)."""
    try:
        cap = int(pltpu.get_tpu_info().vmem_capacity_bytes)
    except Exception:
        cap = 0
    if cap <= 0:
        cap = 64 * 1024 * 1024
    return int(min(cap * 5 // 8, 48 * 1024 * 1024))


# ----------------------------- Pallas kernels -----------------------------

def _bn_stats_kernel(x_ref, gamma_ref, beta_ref, scale_ref, shift_ref,
                     s_ref, ss_ref, *, m_total):
    """Single-pass batch-norm statistics (training mode, biased variance).

    grid = (num_m_tiles,): accumulates per-channel sum and sum-of-squares in
    f32 scratch, and on the last tile emits the per-channel affine (scale,
    shift) such that bn(x) = x * scale + shift.
    """
    i = pl.program_id(0)
    nm = pl.num_programs(0)

    @pl.when(i == 0)
    def _():
        s_ref[...] = jnp.zeros_like(s_ref)
        ss_ref[...] = jnp.zeros_like(ss_ref)

    x = x_ref[...]
    s_ref[...] += jnp.sum(x, axis=0, keepdims=True)
    ss_ref[...] += jnp.sum(x * x, axis=0, keepdims=True)

    @pl.when(i == nm - 1)
    def _():
        inv_m = 1.0 / m_total
        mean = s_ref[...] * inv_m
        var = jnp.maximum(ss_ref[...] * inv_m - mean * mean, 0.0)
        scale = gamma_ref[...] * lax.rsqrt(var + EPS)
        scale_ref[...] = scale
        shift_ref[...] = beta_ref[...] - mean * scale


def _conv_kernel(*refs, ksize, pad_t, pad_l, relu, has_residual):
    """Fused (BN+ReLU prologue) -> KxK stride-1 conv -> (+residual epilogue).

    grid = (batch, out-row tiles).  The raw activation for one image stays
    VMEM-resident across row tiles; the prologue (once per image) normalizes it
    and zero-pads it into a bf16 VMEM scratch.  The K*K taps are an unrolled
    in-kernel loop of MXU matmuls (bf16 in, f32 accumulate) into one local
    accumulator; the residual add and output store happen in the epilogue.
    """
    if has_residual:
        x_ref, scale_ref, shift_ref, w_ref, res_ref, o_ref, xn_ref = refs
    else:
        x_ref, scale_ref, shift_ref, w_ref, o_ref, xn_ref = refs
        res_ref = None

    i = pl.program_id(1)                       # output-row tile index
    k2 = ksize * ksize
    H, W, cin = x_ref.shape
    th, Wo, cout = o_ref.shape
    Hp, Wp, _ = xn_ref.shape
    pad_b = Hp - pad_t - H
    pad_r = Wp - pad_l - W

    # ---- Prologue (once per image): BN affine + ReLU -> bf16 padded scratch.
    @pl.when(i == 0)
    def _():
        # Zero only the pad border (4 thin slabs), not the whole scratch.
        if pad_t > 0:
            xn_ref[:pad_t, :, :] = jnp.zeros((pad_t, Wp, cin), xn_ref.dtype)
        if pad_b > 0:
            xn_ref[pad_t + H:, :, :] = jnp.zeros((pad_b, Wp, cin), xn_ref.dtype)
        if pad_l > 0:
            xn_ref[:, :pad_l, :] = jnp.zeros((Hp, pad_l, cin), xn_ref.dtype)
        if pad_r > 0:
            xn_ref[:, pad_l + W:, :] = jnp.zeros((Hp, pad_r, cin), xn_ref.dtype)
        y = x_ref[...] * scale_ref[...] + shift_ref[...]
        if relu:
            y = jnp.maximum(y, 0.0)
        xn_ref[pad_t:pad_t + H, pad_l:pad_l + W, :] = y.astype(xn_ref.dtype)

    # ---- Unrolled tap loop: one MXU matmul per tap, local f32 accumulator.
    row0 = i * th
    acc = jnp.zeros((th * Wo, cout), jnp.float32)
    for t in range(k2):
        kh = t // ksize
        kw = t % ksize
        window = xn_ref[pl.ds(row0 + kh, th), pl.ds(kw, Wo), :]      # bf16
        acc = acc + jnp.dot(window.reshape(th * Wo, cin), w_ref[t],
                            preferred_element_type=jnp.float32)

    # ---- Epilogue: fused residual add + store.
    if has_residual:
        acc = acc + res_ref[...].reshape(th * Wo, cout)
    o_ref[...] = acc.reshape(th, Wo, cout)


def _conv1x1_kernel(x_ref, scale_ref, shift_ref, w_ref, o_ref, *, relu):
    """BN+ReLU -> 1x1 conv on a row tile (no padded scratch, no halo)."""
    th, W, cin = x_ref.shape
    cout = o_ref.shape[-1]
    y = x_ref[...] * scale_ref[...] + shift_ref[...]
    if relu:
        y = jnp.maximum(y, 0.0)
    lhs = y.reshape(th * W, cin).astype(jnp.bfloat16)
    o_ref[...] = jnp.dot(lhs, w_ref[...],
                         preferred_element_type=jnp.float32).reshape(th, W, cout)


def _head_kernel(x_ref, scale_ref, shift_ref, w_ref, b_ref, o_ref):
    # relu(bn(x)) -> global average pool -> linear.  Head data is a few KiB,
    # so a single-block kernel is appropriate here.
    y = jnp.maximum(x_ref[...] * scale_ref[...] + shift_ref[...], 0.0)
    pooled = jnp.mean(y, axis=(1, 2))
    o_ref[...] = (jnp.dot(pooled, w_ref[...], preferred_element_type=jnp.float32)
                  + b_ref[...])


# ----------------------------- Pallas wrappers -----------------------------

def _pick_m_tile(m):
    for t in (4096, 2048, 1024, 512, 256, 128, 64, 32, 16, 8):
        if t <= m and m % t == 0:
            return t
    return m


def _pick_row_tile(ho, wo, target_rows=1024):
    cands = [t for t in range(1, ho + 1) if ho % t == 0 and t * wo <= target_rows]
    if not cands:
        return 1
    mult8 = [t for t in cands if t % 8 == 0]
    return max(mult8) if mult8 else max(cands)


def bn_batch_affine(x2d, gamma, beta):
    """(M, C) activation -> per-channel (scale, shift) from batch statistics."""
    M, C = x2d.shape
    tm = _pick_m_tile(M)
    kern = functools.partial(_bn_stats_kernel, m_total=float(M))
    return pl.pallas_call(
        kern,
        out_shape=(jax.ShapeDtypeStruct((1, C), jnp.float32),
                   jax.ShapeDtypeStruct((1, C), jnp.float32)),
        grid=(M // tm,),
        in_specs=[pl.BlockSpec((tm, C), lambda i: (i, 0)),
                  pl.BlockSpec((1, C), lambda i: (0, 0)),
                  pl.BlockSpec((1, C), lambda i: (0, 0))],
        out_specs=(pl.BlockSpec((1, C), lambda i: (0, 0)),
                   pl.BlockSpec((1, C), lambda i: (0, 0))),
        scratch_shapes=[pltpu.VMEM((1, C), jnp.float32),
                        pltpu.VMEM((1, C), jnp.float32)],
        compiler_params=pltpu.CompilerParams(
            dimension_semantics=("arbitrary",),
            vmem_limit_bytes=_vmem_limit()),
    )(x2d, gamma.reshape(1, C), beta.reshape(1, C))


def conv_fused(x, scale, shift, w_taps, *, ksize, pads, relu, residual=None):
    """Stride-1 KxK conv with fused BN+ReLU prologue and residual epilogue.

    x:        (N, H, W, Cin) f32 raw activation (pre-BN)
    scale:    (1, Cin) f32, shift: (1, Cin) f32 (identity affine for no BN)
    w_taps:   (K*K, Cin, Cout) bf16 (fully VMEM-resident)
    pads:     (pad_t, pad_b, pad_l, pad_r)
    residual: optional (N, Ho, Wo, Cout) f32, added in the epilogue
    """
    N, H, W, Cin = x.shape
    K2, _, Cout = w_taps.shape
    pad_t, pad_b, pad_l, pad_r = pads
    Hp, Wp = H + pad_t + pad_b, W + pad_l + pad_r
    Ho, Wo = Hp - (ksize - 1), Wp - (ksize - 1)
    th = _pick_row_tile(Ho, Wo)

    kern = functools.partial(_conv_kernel, ksize=ksize, pad_t=pad_t, pad_l=pad_l,
                             relu=relu, has_residual=residual is not None)

    in_specs = [
        pl.BlockSpec((None, H, W, Cin), lambda n, i: (n, 0, 0, 0)),
        pl.BlockSpec((1, Cin), lambda n, i: (0, 0)),
        pl.BlockSpec((1, Cin), lambda n, i: (0, 0)),
        pl.BlockSpec((K2, Cin, Cout), lambda n, i: (0, 0, 0)),   # resident weights
    ]
    inputs = [x, scale.reshape(1, Cin), shift.reshape(1, Cin), w_taps]
    if residual is not None:
        in_specs.append(pl.BlockSpec((None, th, Wo, Cout),
                                     lambda n, i: (n, i, 0, 0)))
        inputs.append(residual)

    return pl.pallas_call(
        kern,
        out_shape=jax.ShapeDtypeStruct((N, Ho, Wo, Cout), jnp.float32),
        grid=(N, Ho // th),
        in_specs=in_specs,
        out_specs=pl.BlockSpec((None, th, Wo, Cout), lambda n, i: (n, i, 0, 0)),
        scratch_shapes=[pltpu.VMEM((Hp, Wp, Cin), jnp.bfloat16)],
        compiler_params=pltpu.CompilerParams(
            dimension_semantics=("parallel", "arbitrary"),
            vmem_limit_bytes=_vmem_limit()),
    )(*inputs)


def conv1x1_fused(x, scale, shift, w_mat, *, relu):
    """BN(+ReLU) -> 1x1 conv; row-tiled input, both grid axes parallel."""
    N, H, W, Cin = x.shape
    Cout = w_mat.shape[-1]
    th = _pick_row_tile(H, W)
    kern = functools.partial(_conv1x1_kernel, relu=relu)
    return pl.pallas_call(
        kern,
        out_shape=jax.ShapeDtypeStruct((N, H, W, Cout), jnp.float32),
        grid=(N, H // th),
        in_specs=[pl.BlockSpec((None, th, W, Cin), lambda n, i: (n, i, 0, 0)),
                  pl.BlockSpec((1, Cin), lambda n, i: (0, 0)),
                  pl.BlockSpec((1, Cin), lambda n, i: (0, 0)),
                  pl.BlockSpec((Cin, Cout), lambda n, i: (0, 0))],
        out_specs=pl.BlockSpec((None, th, W, Cout), lambda n, i: (n, i, 0, 0)),
        compiler_params=pltpu.CompilerParams(
            dimension_semantics=("parallel", "parallel"),
            vmem_limit_bytes=_vmem_limit()),
    )(x, scale.reshape(1, Cin), shift.reshape(1, Cin), w_mat)


def head_forward(x, scale, shift, fc_w, fc_b):
    N, Hf, Wf, C = x.shape
    ncls = fc_w.shape[-1]
    return pl.pallas_call(
        _head_kernel,
        out_shape=jax.ShapeDtypeStruct((N, ncls), jnp.float32),
        grid=(1,),
        in_specs=[pl.BlockSpec((N, Hf, Wf, C), lambda i: (0, 0, 0, 0)),
                  pl.BlockSpec((1, C), lambda i: (0, 0)),
                  pl.BlockSpec((1, C), lambda i: (0, 0)),
                  pl.BlockSpec((C, ncls), lambda i: (0, 0)),
                  pl.BlockSpec((1, ncls), lambda i: (0, 0))],
        out_specs=pl.BlockSpec((N, ncls), lambda i: (0, 0)),
        compiler_params=pltpu.CompilerParams(vmem_limit_bytes=_vmem_limit()),
    )(x, scale, shift, fc_w, fc_b.reshape(1, ncls))


# ----------------------------- weight / layout glue -------------------------

def _w_to_taps(w_oihw):
    """PyTorch (Cout, Cin, kh, kw) -> (kh*kw, Cin, Cout) bf16 tap matrices."""
    co, ci, kh, kw = w_oihw.shape
    return (jnp.transpose(w_oihw, (2, 3, 1, 0))
            .reshape(kh * kw, ci, co).astype(jnp.bfloat16))


def _w1_mat(w_oihw):
    """PyTorch 1x1 weights (Cout, Cin, 1, 1) -> (Cin, Cout) bf16 matrix."""
    co, ci, _, _ = w_oihw.shape
    return jnp.transpose(w_oihw, (2, 3, 1, 0)).reshape(ci, co).astype(jnp.bfloat16)


def _space_to_depth2(x):
    """(N, H, W, C) -> (N, H/2, W/2, 4C) with channel order ((pr, pc), c)."""
    N, H, W, C = x.shape
    x = x.reshape(N, H // 2, 2, W // 2, 2, C)
    x = jnp.transpose(x, (0, 1, 3, 2, 4, 5))
    return x.reshape(N, H // 2, W // 2, 4 * C)


# kh in {0,1,2} of the original 3x3 stride-2 conv -> (tap offset, input parity)
_S2D_MAP = {0: (0, 1), 1: (1, 0), 2: (1, 1)}


def _w3_s2d_taps(w_oihw):
    """3x3 stride-2 (pad 1) weights -> equivalent 2x2 stride-1 taps over the
    space-to-depth input: (4, 4*Cin, Cout) bf16 (unused phases stay zero)."""
    co, ci, _, _ = w_oihw.shape
    w = jnp.transpose(w_oihw, (2, 3, 1, 0))            # (3, 3, ci, co)
    out = jnp.zeros((2, 2, 4 * ci, co), jnp.float32)
    for kh in range(3):
        dr, pr = _S2D_MAP[kh]
        for kw in range(3):
            dc, pc = _S2D_MAP[kw]
            c0 = (pr * 2 + pc) * ci
            out = out.at[dr, dc, c0:c0 + ci, :].set(w[kh, kw])
    return out.reshape(4, 4 * ci, co).astype(jnp.bfloat16)


# ----------------------------- model forward --------------------------------

def basic_block(params, x, stride):
    """WideResNet BasicBlock forward, NHWC in / NHWC out (training-mode BN)."""
    N, H, W, Cin = x.shape
    Cout = params["conv1_w"].shape[0]
    equal_in_out = (Cin == Cout)

    scale1, shift1 = bn_batch_affine(x.reshape(-1, Cin),
                                     params["bn1_gamma"], params["bn1_beta"])

    if stride == 1:
        out = conv_fused(x, scale1, shift1, _w_to_taps(params["conv1_w"]),
                         ksize=3, pads=(1, 1, 1, 1), relu=True)
        if equal_in_out:
            residual = x
        else:
            residual = conv1x1_fused(x, scale1, shift1,
                                     _w1_mat(params["convShortcut_w"]), relu=True)
    else:
        # stride 2: rewrite the 3x3 conv as a stride-1 conv over the
        # space-to-depth input; the 1x1 shortcut only needs the even pixels.
        xs = _space_to_depth2(x)
        scale4 = jnp.tile(scale1, (1, 4))
        shift4 = jnp.tile(shift1, (1, 4))
        out = conv_fused(xs, scale4, shift4, _w3_s2d_taps(params["conv1_w"]),
                         ksize=2, pads=(1, 0, 1, 0), relu=True)
        residual = conv1x1_fused(x[:, ::2, ::2, :], scale1, shift1,
                                 _w1_mat(params["convShortcut_w"]), relu=True)

    # TODO(synk): F.dropout for dropRate > 0 not implemented (module default 0.0).

    scale2, shift2 = bn_batch_affine(out.reshape(-1, Cout),
                                     params["bn2_gamma"], params["bn2_beta"])
    return conv_fused(out, scale2, shift2, _w_to_taps(params["conv2_w"]),
                      ksize=3, pads=(1, 1, 1, 1), relu=True, residual=residual)


def wideresnet_forward(params, x_nchw):
    """Full WideResNet forward (NCHW image in, logits out); NHWC internally."""
    x = jnp.transpose(x_nchw, (0, 2, 3, 1)).astype(jnp.float32)

    ident_s = jnp.ones((1, x.shape[-1]), jnp.float32)
    ident_b = jnp.zeros((1, x.shape[-1]), jnp.float32)
    h = conv_fused(x, ident_s, ident_b, _w_to_taps(params["conv1_w"]),
                   ksize=3, pads=(1, 1, 1, 1), relu=False)

    for gi, group in enumerate(params["blocks"]):
        for bi, bp in enumerate(group):
            stride = 2 if (gi > 0 and bi == 0) else 1
            h = basic_block(bp, h, stride)

    C = h.shape[-1]
    scale, shift = bn_batch_affine(h.reshape(-1, C),
                                   params["bn_gamma"], params["bn_beta"])
    return head_forward(h, scale, shift, params["fc_w"], params["fc_b"])


# ----------------------------- initialization -------------------------------

def _conv_init(key, cout, cin, ks):
    std = math.sqrt(2.0 / (ks * ks * cout))
    return std * jax.random.normal(key, (cout, cin, ks, ks), jnp.float32)


def init_basic_block(key, in_planes, out_planes):
    ks = jax.random.split(key, 8)
    p = {
        "bn1_gamma": 1.0 + 0.1 * jax.random.normal(ks[0], (in_planes,), jnp.float32),
        "bn1_beta": 0.1 * jax.random.normal(ks[1], (in_planes,), jnp.float32),
        "conv1_w": _conv_init(ks[2], out_planes, in_planes, 3),
        "bn2_gamma": 1.0 + 0.1 * jax.random.normal(ks[3], (out_planes,), jnp.float32),
        "bn2_beta": 0.1 * jax.random.normal(ks[4], (out_planes,), jnp.float32),
        "conv2_w": _conv_init(ks[5], out_planes, out_planes, 3),
    }
    if in_planes != out_planes:
        p["convShortcut_w"] = _conv_init(ks[6], out_planes, in_planes, 1)
    return p


def init_wideresnet(key, depth=10, num_classes=10, widen_factor=2):
    assert (depth - 4) % 6 == 0
    n = (depth - 4) // 6
    nch = [16, 16 * widen_factor, 32 * widen_factor, 64 * widen_factor]
    ki = iter(jax.random.split(key, 3 * n + 8))
    params = {"conv1_w": _conv_init(next(ki), nch[0], 3, 3)}
    blocks = []
    for gi in range(3):
        group = []
        for bi in range(n):
            cin = nch[gi] if bi == 0 else nch[gi + 1]
            group.append(init_basic_block(next(ki), cin, nch[gi + 1]))
        blocks.append(group)
    params["blocks"] = blocks
    params["bn_gamma"] = 1.0 + 0.1 * jax.random.normal(next(ki), (nch[3],), jnp.float32)
    params["bn_beta"] = 0.1 * jax.random.normal(next(ki), (nch[3],), jnp.float32)
    params["fc_w"] = 0.05 * jax.random.normal(next(ki), (nch[3], num_classes), jnp.float32)
    params["fc_b"] = jnp.zeros((num_classes,), jnp.float32)
    return params


# ----------------------------- pure-JAX reference ---------------------------

def _ref_bn_relu(x, g, b):
    mean = x.mean(axis=(0, 1, 2))
    var = x.var(axis=(0, 1, 2))
    return jnp.maximum((x - mean) * lax.rsqrt(var + EPS) * g + b, 0.0)


def _ref_conv(x, w_oihw, stride, pad):
    # Same numerics as the kernels: bf16 MXU inputs with f32 accumulation.
    w = jnp.transpose(w_oihw, (2, 3, 1, 0)).astype(jnp.bfloat16)
    return lax.conv_general_dilated(
        x.astype(jnp.bfloat16), w, (stride, stride), [(pad, pad), (pad, pad)],
        dimension_numbers=("NHWC", "HWIO", "NHWC"),
        preferred_element_type=jnp.float32)


def _ref_basic_block(p, x, stride):
    equal = x.shape[-1] == p["conv1_w"].shape[0]
    act = _ref_bn_relu(x, p["bn1_gamma"], p["bn1_beta"])
    out = _ref_conv(act, p["conv1_w"], stride, 1)
    out = _ref_bn_relu(out, p["bn2_gamma"], p["bn2_beta"])
    out = _ref_conv(out, p["conv2_w"], 1, 1)
    res = x if equal else _ref_conv(act, p["convShortcut_w"], stride, 0)
    return res + out


def _ref_wideresnet(params, x_nchw):
    x = jnp.transpose(x_nchw, (0, 2, 3, 1)).astype(jnp.float32)
    h = _ref_conv(x, params["conv1_w"], 1, 1)
    for gi, group in enumerate(params["blocks"]):
        for bi, bp in enumerate(group):
            stride = 2 if (gi > 0 and bi == 0) else 1
            h = _ref_basic_block(bp, h, stride)
    h = _ref_bn_relu(h, params["bn_gamma"], params["bn_beta"])
    pooled = h.mean(axis=(1, 2))
    return pooled @ params["fc_w"] + params["fc_b"]


# ----------------------------- main ------------------------------------------

if __name__ == "__main__":
    root = jax.random.PRNGKey(0)
    k_xa, k_pa, k_xb, k_pb, k_xn, k_pn = jax.random.split(root, 6)

    # --- BasicBlock, identity shortcut (in == out, stride 1), NHWC ---
    xa = jax.random.normal(k_xa, (2, 16, 16, 32), jnp.float32)
    pa = init_basic_block(k_pa, 32, 32)
    ya = basic_block(pa, xa, stride=1)
    jax.block_until_ready(ya)
    ra = _ref_basic_block(pa, xa, 1)
    assert ya.shape == (2, 16, 16, 32), ya.shape
    assert jnp.allclose(ya, ra, atol=1e-2, rtol=1e-2), "BasicBlock (identity) mismatch"

    # --- BasicBlock, 1x1 projection shortcut, stride 2 ---
    xb = jax.random.normal(k_xb, (2, 16, 16, 16), jnp.float32)
    pb = init_basic_block(k_pb, 16, 32)
    yb = basic_block(pb, xb, stride=2)
    jax.block_until_ready(yb)
    rb = _ref_basic_block(pb, xb, 2)
    assert yb.shape == (2, 8, 8, 32), yb.shape
    assert jnp.allclose(yb, rb, atol=1e-2, rtol=1e-2), "BasicBlock (projection) mismatch"

    # --- Full WideResNet-10-2 forward on a CIFAR-sized input ---
    xn = jax.random.normal(k_xn, (2, 3, 32, 32), jnp.float32)
    pn = init_wideresnet(k_pn, depth=10, num_classes=10, widen_factor=2)
    logits = jax.jit(wideresnet_forward)(pn, xn)
    jax.block_until_ready(logits)
    ref_logits = _ref_wideresnet(pn, xn)
    assert logits.shape == (2, 10), logits.shape
    assert jnp.allclose(logits, ref_logits, atol=2e-2, rtol=2e-2), "WideResNet mismatch"

    print("KERNEL_OK")
</pallas_src>

<mosaic_0001>
module attributes {stable_mosaic.version = 11 : i64} {
  func.func @_bn_stats_kernel(%arg0: i32, %arg1: memref<512x32xf32, #tpu.memory_space<vmem>>, %arg2: memref<1x32xf32, #tpu.memory_space<vmem>>, %arg3: memref<1x32xf32, #tpu.memory_space<vmem>>, %arg4: memref<1x32xf32, #tpu.memory_space<vmem>>, %arg5: memref<1x32xf32, #tpu.memory_space<vmem>>, %arg6: memref<1x32xf32, #tpu.memory_space<vmem>>, %arg7: memref<1x32xf32, #tpu.memory_space<vmem>>) attributes {dimension_semantics = [#tpu.dimension_semantics<arbitrary>], iteration_bounds = array<i64: 1>, scalar_prefetch = 0 : i64, scratch_operands = 2 : i64, tpu.core_type = #tpu.core_type<tc>, window_params = [{transform_indices = @transform_0, window_bounds = array<i64: 512, 32>}, {pipeline_mode = #tpu.pipeline_mode<synchronous>, transform_indices = @transform_1, window_bounds = array<i64: 1, 32>}, {pipeline_mode = #tpu.pipeline_mode<synchronous>, transform_indices = @transform_2, window_bounds = array<i64: 1, 32>}, {pipeline_mode = #tpu.pipeline_mode<synchronous>, transform_indices = @transform_3, window_bounds = array<i64: 1, 32>}, {pipeline_mode = #tpu.pipeline_mode<synchronous>, transform_indices = @transform_4, window_bounds = array<i64: 1, 32>}]} {
    %c0_i32 = arith.constant 0 : i32
    %0 = arith.cmpi eq, %arg0, %c0_i32 : i32
    %1 = arith.extui %0 : i1 to i32
    %c0_i32_0 = arith.constant 0 : i32
    %2 = arith.cmpi ne, %1, %c0_i32_0 : i32
    scf.if %2 {
      %cst_13 = arith.constant 0.000000e+00 : f32
      %18 = vector.broadcast %cst_13 : f32 to vector<1x32xf32>
      %c0_14 = arith.constant 0 : index
      %c0_15 = arith.constant 0 : index
      %19 = vector.load %arg6[%c0_14, %c0_15] : memref<1x32xf32, #tpu.memory_space<vmem>>, vector<1x32xf32>
      tpu.vector_store %arg6[%c0_14, %c0_15], %18 {strides = array<i32>} : memref<1x32xf32, #tpu.memory_space<vmem>>, vector<1x32xf32>,
      %cst_16 = arith.constant 0.000000e+00 : f32
      %20 = vector.broadcast %cst_16 : f32 to vector<1x32xf32>
      %c0_17 = arith.constant 0 : index
      %c0_18 = arith.constant 0 : index
      %21 = vector.load %arg7[%c0_17, %c0_18] : memref<1x32xf32, #tpu.memory_space<vmem>>, vector<1x32xf32>
      tpu.vector_store %arg7[%c0_17, %c0_18], %20 {strides = array<i32>} : memref<1x32xf32, #tpu.memory_space<vmem>>, vector<1x32xf32>,
    } else {
    }
    %c0 = arith.constant 0 : index
    %c0_1 = arith.constant 0 : index
    %3 = vector.load %arg1[%c0, %c0_1] : memref<512x32xf32, #tpu.memory_space<vmem>>, vector<512x32xf32>
    %c0_2 = arith.constant 0 : index
    %c0_3 = arith.constant 0 : index
    %4 = vector.load %arg6[%c0_2, %c0_3] : memref<1x32xf32, #tpu.memory_space<vmem>>, vector<1x32xf32>
    %cst = arith.constant dense<0.000000e+00> : vector<32xf32>
    %5 = vector.multi_reduction <add>, %3, %cst [0] : vector<512x32xf32> to vector<32xf32>
    %6 = vector.shape_cast %5 : vector<32xf32> to vector<1x32xf32>
    %7 = arith.addf %4, %6 : vector<1x32xf32>
    %c0_4 = arith.constant 0 : index
    %c0_5 = arith.constant 0 : index
    %8 = vector.load %arg6[%c0_4, %c0_5] : memref<1x32xf32, #tpu.memory_space<vmem>>, vector<1x32xf32>
    tpu.vector_store %arg6[%c0_4, %c0_5], %7 {strides = array<i32>} : memref<1x32xf32, #tpu.memory_space<vmem>>, vector<1x32xf32>,
    %c0_6 = arith.constant 0 : index
    %c0_7 = arith.constant 0 : index
    %9 = vector.load %arg7[%c0_6, %c0_7] : memref<1x32xf32, #tpu.memory_space<vmem>>, vector<1x32xf32>
    %10 = arith.mulf %3, %3 : vector<512x32xf32>
    %cst_8 = arith.constant dense<0.000000e+00> : vector<32xf32>
    %11 = vector.multi_reduction <add>, %10, %cst_8 [0] : vector<512x32xf32> to vector<32xf32>
    %12 = vector.shape_cast %11 : vector<32xf32> to vector<1x32xf32>
    %13 = arith.addf %9, %12 : vector<1x32xf32>
    %c0_9 = arith.constant 0 : index
    %c0_10 = arith.constant 0 : index
    %14 = vector.load %arg7[%c0_9, %c0_10] : memref<1x32xf32, #tpu.memory_space<vmem>>, vector<1x32xf32>
    tpu.vector_store %arg7[%c0_9, %c0_10], %13 {strides = array<i32>} : memref<1x32xf32, #tpu.memory_space<vmem>>, vector<1x32xf32>,
    %c0_i32_11 = arith.constant 0 : i32
    %15 = arith.cmpi eq, %arg0, %c0_i32_11 : i32
    %16 = arith.extui %15 : i1 to i32
    %c0_i32_12 = arith.constant 0 : i32
    %17 = arith.cmpi ne, %16, %c0_i32_12 : i32
    scf.if %17 {
      %c0_13 = arith.constant 0 : index
      %c0_14 = arith.constant 0 : index
      %18 = vector.load %arg6[%c0_13, %c0_14] : memref<1x32xf32, #tpu.memory_space<vmem>>, vector<1x32xf32>
      %cst_15 = arith.constant 0.001953125 : f32
      %19 = vector.broadcast %cst_15 : f32 to vector<1x32xf32>
      %20 = arith.mulf %18, %19 : vector<1x32xf32>
      %c0_16 = arith.constant 0 : index
      %c0_17 = arith.constant 0 : index
      %21 = vector.load %arg7[%c0_16, %c0_17] : memref<1x32xf32, #tpu.memory_space<vmem>>, vector<1x32xf32>
      %cst_18 = arith.constant 0.001953125 : f32
      %22 = vector.broadcast %cst_18 : f32 to vector<1x32xf32>
      %23 = arith.mulf %21, %22 : vector<1x32xf32>
      %24 = arith.mulf %20, %20 : vector<1x32xf32>
      %25 = arith.subf %23, %24 : vector<1x32xf32>
      %cst_19 = arith.constant 0.000000e+00 : f32
      %26 = vector.broadcast %cst_19 : f32 to vector<1x32xf32>
      %27 = arith.maximumf %25, %26 : vector<1x32xf32>
      %c0_20 = arith.constant 0 : index
      %c0_21 = arith.constant 0 : index
      %28 = vector.load %arg2[%c0_20, %c0_21] : memref<1x32xf32, #tpu.memory_space<vmem>>, vector<1x32xf32>
      %cst_22 = arith.constant 9.99999974E-6 : f32
      %29 = vector.broadcast %cst_22 : f32 to vector<1x32xf32>
      %30 = arith.addf %27, %29 : vector<1x32xf32>
      %31 = math.rsqrt %30 : vector<1x32xf32>
      %32 = arith.mulf %28, %31 : vector<1x32xf32>
      %c0_23 = arith.constant 0 : index
      %c0_24 = arith.constant 0 : index
      %33 = vector.load %arg4[%c0_23, %c0_24] : memref<1x32xf32, #tpu.memory_space<vmem>>, vector<1x32xf32>
      tpu.vector_store %arg4[%c0_23, %c0_24], %32 {strides = array<i32>} : memref<1x32xf32, #tpu.memory_space<vmem>>, vector<1x32xf32>,
      %c0_25 = arith.constant 0 : index
      %c0_26 = arith.constant 0 : index
      %34 = vector.load %arg3[%c0_25, %c0_26] : memref<1x32xf32, #tpu.memory_space<vmem>>, vector<1x32xf32>
      %35 = arith.mulf %20, %32 : vector<1x32xf32>
      %36 = arith.subf %34, %35 : vector<1x32xf32>
      %c0_27 = arith.constant 0 : index
      %c0_28 = arith.constant 0 : index
      %37 = vector.load %arg5[%c0_27, %c0_28] : memref<1x32xf32, #tpu.memory_space<vmem>>, vector<1x32xf32>
      tpu.vector_store %arg5[%c0_27, %c0_28], %36 {strides = array<i32>} : memref<1x32xf32, #tpu.memory_space<vmem>>, vector<1x32xf32>,
    } else {
    }
    return
  }
  func.func @transform_0(%arg0: i32) -> (i32, i32) {
    %c0_i32 = arith.constant 0 : i32
    %c0_i32_0 = arith.constant 0 : i32
    return %arg0, %c0_i32 : i32, i32
  }
  func.func @transform_1(%arg0: i32) -> (i32, i32) {
    %c0_i32 = arith.constant 0 : i32
    %c0_i32_0 = arith.constant 0 : i32
    %c0_i32_1 = arith.constant 0 : i32
    return %c0_i32, %c0_i32_0 : i32, i32
  }
  func.func @transform_2(%arg0: i32) -> (i32, i32) {
    %c0_i32 = arith.constant 0 : i32
    %c0_i32_0 = arith.constant 0 : i32
    %c0_i32_1 = arith.constant 0 : i32
    return %c0_i32, %c0_i32_0 : i32, i32
  }
  func.func @transform_3(%arg0: i32) -> (i32, i32) {
    %c0_i32 = arith.constant 0 : i32
    %c0_i32_0 = arith.constant 0 : i32
    %c0_i32_1 = arith.constant 0 : i32
    return %c0_i32, %c0_i32_0 : i32, i32
  }
  func.func @transform_4(%arg0: i32) -> (i32, i32) {
    %c0_i32 = arith.constant 0 : i32
    %c0_i32_0 = arith.constant 0 : i32
    %c0_i32_1 = arith.constant 0 : i32
    return %c0_i32, %c0_i32_0 : i32, i32
  }
}

</mosaic_0001>

<llo_original>
// kernel: tpu_custom_call.1
$region0: #{tpu_custom_call.1}
  #allocation0 [shape = 'u32[]', space=smem, size = 0x4, offset = 0x4, fixed_abs, tag = 'smem constant byte address 0x4 - core index']
  #allocation1 [shape = 'u32[72,128]{1,0:T(1,128)}', space=vmem, size = 0x9000, scoped, tag = 'internal scratch']
  #allocation2 [shape = 'f32[1,32]{1,0:T(1,128)}', space=vmem, size = 0x200, scoped, tag = 'scratch operand']
  #allocation3 [shape = 'f32[1,32]{1,0:T(1,128)}', space=vmem, size = 0x200, scoped, tag = 'scratch operand']
  %s0 = inlined_call_operand.vmem [shape: f32[512,32], index: 0, kind: input, shape index: {}]
  %s1 = inlined_call_operand.vmem [shape: f32[1,32], index: 1, kind: input, shape index: {}]
  %s2 = inlined_call_operand.vmem [shape: f32[1,32], index: 2, kind: input, shape index: {}]
  %s3 = inlined_call_operand.hbm [shape: f32[1,32], index: 3, kind: output, shape index: {0}]
  %s4 = inlined_call_operand.hbm [shape: f32[1,32], index: 4, kind: output, shape index: {1}]
  %5 = xla_tuple %s3, %s4
  %s6 = sld [smem:[#allocation0]]
  $region38: #{tpu_custom_call.1} parent=0
    _
  %s8 = ssub.s32 1, %s6
  %s9 = scalar_select 0, %s8, %s6
  $region1: #{tpu_custom_call.1} parent=0
    #allocation4 [shape = 'u8[512]{0}', space=vmem, size = 0x400, scoped, tag = 'output window, operand 0, single buffered']
    #allocation5 [shape = 's32[1]{0}', space=sflag, size = 0x4, scoped, tag = 'scoped memory for tpu_custom_call.1']
    #allocation6 [shape = 'u8[512]{0}', space=vmem, size = 0x400, scoped, tag = 'output window, operand 1, single buffered']
    #allocation7 [shape = 's32[1]{0}', space=sflag, size = 0x4, scoped, tag = 'scoped memory for tpu_custom_call.1']
    %10 = vsyncpa [#allocation5], 0
    %11 = vsyncpa [#allocation7], 0
    // Predicated region
    $region2: #{tpu_custom_call.1} parent=1 // pred_check
      _
    $region3: #{tpu_custom_call.1} parent=1 // pred_check_branch
      %13 = sbr.rel (0) target = $region5
    $region4: #{tpu_custom_call.1} parent=1 // pred_region
      _
    $region5: #{tpu_custom_call.1} parent=1 // pred_fallthru
      _
    // Predicated region
    $region6: #{tpu_custom_call.1} parent=1 // pred_check
      _
    $region7: #{tpu_custom_call.1} parent=1 // pred_check_branch
      %15 = sbr.rel (0) target = $region9
    $region8: #{tpu_custom_call.1} parent=1 // pred_region
      _
    $region9: #{tpu_custom_call.1} parent=1 // pred_fallthru
      _
    // Predicated region
    $region10: #{tpu_custom_call.1} parent=1 // pred_check
      _
    $region11: #{tpu_custom_call.1} parent=1 // pred_check_branch
      %17 = sbr.rel (0) target = $region13
    $region12: #{tpu_custom_call.1} parent=1 // pred_region
      _
    $region13: #{tpu_custom_call.1} parent=1 // pred_fallthru
      _
    %p18 = scmp.eq.s32.totalorder 0, 0
    // Predicated region
    $region14: #{tpu_custom_call.1} parent=1 // pred_check
      %p19 = pneg %p18
    $region15: #{tpu_custom_call.1} parent=1 // pred_check_branch
      %21 = sbr.rel (%p19) target = $region17
    $region16: #{tpu_custom_call.1} parent=1 // pred_region
      %vm22 = vcmask 253952
      %23 = vst.msk [vmem:[#allocation2] sm:$0x1] %vm22, 0.0
      %24 = vst.msk [vmem:[#allocation3] sm:$0x1] %vm22, 0.0
    $region17: #{tpu_custom_call.1} parent=1 // pred_fallthru
      _
    %v25 = vld [vmem:[%s0] sm:$0xff]
    %v26 = vld [vmem:[%s0 + $0x8] sm:$0xff]
    %v27 = vld [vmem:[%s0 + $0x10] sm:$0xff]
    %v28 = vld [vmem:[%s0 + $0x18] sm:$0xff]
    %v29 = vld [vmem:[%s0 + $0x20] sm:$0xff]
    %v30 = vld [vmem:[%s0 + $0x28] sm:$0xff]
    %v31 = vld [vmem:[%s0 + $0x30] sm:$0xff]
    %v32 = vld [vmem:[%s0 + $0x38] sm:$0xff]
    %v33 = vld [vmem:[%s0 + $0x40] sm:$0xff]
    %v34 = vld [vmem:[%s0 + $0x48] sm:$0xff]
    %v35 = vld [vmem:[%s0 + $0x50] sm:$0xff]
    %v36 = vld [vmem:[%s0 + $0x58] sm:$0xff]
    %v37 = vld [vmem:[%s0 + $0x60] sm:$0xff]
    %v38 = vld [vmem:[%s0 + $0x68] sm:$0xff]
    %v39 = vld [vmem:[%s0 + $0x70] sm:$0xff]
    %v40 = vld [vmem:[%s0 + $0x78] sm:$0xff]
    %v41 = vld [vmem:[%s0 + $0x80] sm:$0xff]
    %v42 = vld [vmem:[%s0 + $0x88] sm:$0xff]
    %v43 = vld [vmem:[%s0 + $0x90] sm:$0xff]
    %v44 = vld [vmem:[%s0 + $0x98] sm:$0xff]
    %v45 = vld [vmem:[%s0 + $0xa0] sm:$0xff]
    %v46 = vld [vmem:[%s0 + $0xa8] sm:$0xff]
    %v47 = vld [vmem:[%s0 + $0xb0] sm:$0xff]
    %v48 = vld [vmem:[%s0 + $0xb8] sm:$0xff]
    %v49 = vld [vmem:[%s0 + $0xc0] sm:$0xff]
    %v50 = vld [vmem:[%s0 + $0xc8] sm:$0xff]
    %v51 = vld [vmem:[%s0 + $0xd0] sm:$0xff]
    %v52 = vld [vmem:[%s0 + $0xd8] sm:$0xff]
    %v53 = vld [vmem:[%s0 + $0xe0] sm:$0xff]
    %v54 = vld [vmem:[%s0 + $0xe8] sm:$0xff]
    %v55 = vld [vmem:[%s0 + $0xf0] sm:$0xff]
    %v56 = vld [vmem:[%s0 + $0xf8] sm:$0xff]
    %v57 = vld [vmem:[%s0 + $0x100] sm:$0xff]
    %v58 = vld [vmem:[%s0 + $0x108] sm:$0xff]
    %v59 = vld [vmem:[%s0 + $0x110] sm:$0xff]
    %v60 = vld [vmem:[%s0 + $0x118] sm:$0xff]
    %v61 = vld [vmem:[%s0 + $0x120] sm:$0xff]
    %v62 = vld [vmem:[%s0 + $0x128] sm:$0xff]
    %v63 = vld [vmem:[%s0 + $0x130] sm:$0xff]
    %v64 = vld [vmem:[%s0 + $0x138] sm:$0xff]
    %v65 = vld [vmem:[%s0 + $0x140] sm:$0xff]
    %v66 = vld [vmem:[%s0 + $0x148] sm:$0xff]
    %v67 = vld [vmem:[%s0 + $0x150] sm:$0xff]
    %v68 = vld [vmem:[%s0 + $0x158] sm:$0xff]
    %v69 = vld [vmem:[%s0 + $0x160] sm:$0xff]
    %v70 = vld [vmem:[%s0 + $0x168] sm:$0xff]
    %v71 = vld [vmem:[%s0 + $0x170] sm:$0xff]
    %v72 = vld [vmem:[%s0 + $0x178] sm:$0xff]
    %v73 = vld [vmem:[%s0 + $0x180] sm:$0xff]
    %v74 = vld [vmem:[%s0 + $0x188] sm:$0xff]
    %v75 = vld [vmem:[%s0 + $0x190] sm:$0xff]
    %v76 = vld [vmem:[%s0 + $0x198] sm:$0xff]
    %v77 = vld [vmem:[%s0 + $0x1a0] sm:$0xff]
    %v78 = vld [vmem:[%s0 + $0x1a8] sm:$0xff]
    %v79 = vld [vmem:[%s0 + $0x1b0] sm:$0xff]
    %v80 = vld [vmem:[%s0 + $0x1b8] sm:$0xff]
    %v81 = vld [vmem:[%s0 + $0x1c0] sm:$0xff]
    %v82 = vld [vmem:[%s0 + $0x1c8] sm:$0xff]
    %v83 = vld [vmem:[%s0 + $0x1d0] sm:$0xff]
    %v84 = vld [vmem:[%s0 + $0x1d8] sm:$0xff]
    %v85 = vld [vmem:[%s0 + $0x1e0] sm:$0xff]
    %v86 = vld [vmem:[%s0 + $0x1e8] sm:$0xff]
    %v87 = vld [vmem:[%s0 + $0x1f0] sm:$0xff]
    %v88 = vld [vmem:[%s0 + $0x1f8] sm:$0xff]
    %v89 = vld [vmem:[#allocation2] sm:$0x1]
    %vm90 = vcmask 261120
    %v91 = vsel %vm90, %v25, 0.0
    %v92 = vsel %vm90, %v26, 0.0
    %v93 = vadd.f32 %v91, %v92
    %v94 = vsel %vm90, %v27, 0.0
    %v95 = vadd.f32 %v93, %v94
    %v96 = vsel %vm90, %v28, 0.0
    %v97 = vadd.f32 %v95, %v96
    %v98 = vsel %vm90, %v29, 0.0
    %v99 = vadd.f32 %v97, %v98
    %v100 = vsel %vm90, %v30, 0.0
    %v101 = vadd.f32 %v99, %v100
    %v102 = vsel %vm90, %v31, 0.0
    %v103 = vadd.f32 %v101, %v102
    %v104 = vsel %vm90, %v32, 0.0
    %v105 = vadd.f32 %v103, %v104
    %v106 = vsel %vm90, %v33, 0.0
    %v107 = vadd.f32 %v105, %v106
    %v108 = vsel %vm90, %v34, 0.0
    %v109 = vadd.f32 %v107, %v108
    %v110 = vsel %vm90, %v35, 0.0
    %v111 = vadd.f32 %v109, %v110
    %v112 = vsel %vm90, %v36, 0.0
    %v113 = vadd.f32 %v111, %v112
    %v114 = vsel %vm90, %v37, 0.0
    %v115 = vadd.f32 %v113, %v114
    %v116 = vsel %vm90, %v38, 0.0
    %v117 = vadd.f32 %v115, %v116
    %v118 = vsel %vm90, %v39, 0.0
    %v119 = vadd.f32 %v117, %v118
    %v120 = vsel %vm90, %v40, 0.0
    %v121 = vadd.f32 %v119, %v120
    %v122 = vsel %vm90, %v41, 0.0
    %v123 = vadd.f32 %v121, %v122
    %v124 = vsel %vm90, %v42, 0.0
    %v125 = vadd.f32 %v123, %v124
    %v126 = vsel %vm90, %v43, 0.0
    %v127 = vadd.f32 %v125, %v126
    %v128 = vsel %vm90, %v44, 0.0
    %v129 = vadd.f32 %v127, %v128
    %v130 = vsel %vm90, %v45, 0.0
    %v131 = vadd.f32 %v129, %v130
    %v132 = vsel %vm90, %v46, 0.0
    %v133 = vadd.f32 %v131, %v132
    %v134 = vsel %vm90, %v47, 0.0
    %v135 = vadd.f32 %v133, %v134
    %v136 = vsel %vm90, %v48, 0.0
    %v137 = vadd.f32 %v135, %v136
    %v138 = vsel %vm90, %v49, 0.0
    %v139 = vadd.f32 %v137, %v138
    %v140 = vsel %vm90, %v50, 0.0
    %v141 = vadd.f32 %v139, %v140
    %v142 = vsel %vm90, %v51, 0.0
    %v143 = vadd.f32 %v141, %v142
    %v144 = vsel %vm90, %v52, 0.0
    %v145 = vadd.f32 %v143, %v144
    %v146 = vsel %vm90, %v53, 0.0
    %v147 = vadd.f32 %v145, %v146
    %v148 = vsel %vm90, %v54, 0.0
    %v149 = vadd.f32 %v147, %v148
    %v150 = vsel %vm90, %v55, 0.0
    %v151 = vadd.f32 %v149, %v150
    %v152 = vsel %vm90, %v56, 0.0
    %v153 = vadd.f32 %v151, %v152
    %v154 = vsel %vm90, %v57, 0.0
    %v155 = vadd.f32 %v153, %v154
    %v156 = vsel %vm90, %v58, 0.0
    %v157 = vadd.f32 %v155, %v156
    %v158 = vsel %vm90, %v59, 0.0
    %v159 = vadd.f32 %v157, %v158
    %v160 = vsel %vm90, %v60, 0.0
    %v161 = vadd.f32 %v159, %v160
    %v162 = vsel %vm90, %v61, 0.0
    %v163 = vadd.f32 %v161, %v162
    %v164 = vsel %vm90, %v62, 0.0
    %v165 = vadd.f32 %v163, %v164
    %v166 = vsel %vm90, %v63, 0.0
    %v167 = vadd.f32 %v165, %v166
    %v168 = vsel %vm90, %v64, 0.0
    %v169 = vadd.f32 %v167, %v168
    %v170 = vsel %vm90, %v65, 0.0
    %v171 = vadd.f32 %v169, %v170
    %v172 = vsel %vm90, %v66, 0.0
    %v173 = vadd.f32 %v171, %v172
    %v174 = vsel %vm90, %v67, 0.0
    %v175 = vadd.f32 %v173, %v174
    %v176 = vsel %vm90, %v68, 0.0
    %v177 = vadd.f32 %v175, %v176
    %v178 = vsel %vm90, %v69, 0.0
    %v179 = vadd.f32 %v177, %v178
    %v180 = vsel %vm90, %v70, 0.0
    %v181 = vadd.f32 %v179, %v180
    %v182 = vsel %vm90, %v71, 0.0
    %v183 = vadd.f32 %v181, %v182
    %v184 = vsel %vm90, %v72, 0.0
    %v185 = vadd.f32 %v183, %v184
    %v186 = vsel %vm90, %v73, 0.0
    %v187 = vadd.f32 %v185, %v186
    %v188 = vsel %vm90, %v74, 0.0
    %v189 = vadd.f32 %v187, %v188
    %v190 = vsel %vm90, %v75, 0.0
    %v191 = vadd.f32 %v189, %v190
    %v192 = vsel %vm90, %v76, 0.0
    %v193 = vadd.f32 %v191, %v192
    %v194 = vsel %vm90, %v77, 0.0
    %v195 = vadd.f32 %v193, %v194
    %v196 = vsel %vm90, %v78, 0.0
    %v197 = vadd.f32 %v195, %v196
    %v198 = vsel %vm90, %v79, 0.0
    %v199 = vadd.f32 %v197, %v198
    %v200 = vsel %vm90, %v80, 0.0
    %v201 = vadd.f32 %v199, %v200
    %v202 = vsel %vm90, %v81, 0.0
    %v203 = vadd.f32 %v201, %v202
    %v204 = vsel %vm90, %v82, 0.0
    %v205 = vadd.f32 %v203, %v204
    %v206 = vsel %vm90, %v83, 0.0
    %v207 = vadd.f32 %v205, %v206
    %v208 = vsel %vm90, %v84, 0.0
    %v209 = vadd.f32 %v207, %v208
    %v210 = vsel %vm90, %v85, 0.0
    %v211 = vadd.f32 %v209, %v210
    %v212 = vsel %vm90, %v86, 0.0
    %v213 = vadd.f32 %v211, %v212
    %v214 = vsel %vm90, %v87, 0.0
    %v215 = vadd.f32 %v213, %v214
    %v216 = vsel %vm90, %v88, 0.0
    %v217 = vadd.f32 %v215, %v216
    %v218 = vrot.slane %v217, 4
    %v219 = vadd.f32 %v217, %v218
    %v220 = vrot.slane %v219, 2
    %v221 = vadd.f32 %v219, %v220
    %v222 = vrot.slane %v221, 1
    %v223 = vadd.f32 %v221, %v222
    %v224 = vadd.f32 %v89, %v223
    %vm225 = vcmask 253952
    %226 = vst.msk [vmem:[#allocation2] sm:$0x1] %vm225, %v224
    %v227 = vld [vmem:[#allocation3] sm:$0x1]
    %v228 = vmul.f32 %v25, %v25
    %v229 = vmul.f32 %v26, %v26
    %v230 = vmul.f32 %v27, %v27
    %v231 = vmul.f32 %v28, %v28
    %v232 = vmul.f32 %v29, %v29
    %v233 = vmul.f32 %v30, %v30
    %v234 = vmul.f32 %v31, %v31
    %v235 = vmul.f32 %v32, %v32
    %v236 = vmul.f32 %v33, %v33
    %v237 = vmul.f32 %v34, %v34
    %v238 = vmul.f32 %v35, %v35
    %v239 = vmul.f32 %v36, %v36
    %v240 = vmul.f32 %v37, %v37
    %v241 = vmul.f32 %v38, %v38
    %v242 = vmul.f32 %v39, %v39
    %v243 = vmul.f32 %v40, %v40
    %v244 = vmul.f32 %v41, %v41
    %v245 = vmul.f32 %v42, %v42
    %v246 = vmul.f32 %v43, %v43
    %v247 = vmul.f32 %v44, %v44
    %v248 = vmul.f32 %v45, %v45
    %v249 = vmul.f32 %v46, %v46
    %v250 = vmul.f32 %v47, %v47
    %v251 = vmul.f32 %v48, %v48
    %v252 = vmul.f32 %v49, %v49
    %v253 = vmul.f32 %v50, %v50
    %v254 = vmul.f32 %v51, %v51
    %v255 = vmul.f32 %v52, %v52
    %v256 = vmul.f32 %v53, %v53
    %v257 = vmul.f32 %v54, %v54
    %v258 = vmul.f32 %v55, %v55
    %v259 = vmul.f32 %v56, %v56
    %v260 = vmul.f32 %v57, %v57
    %v261 = vmul.f32 %v58, %v58
    %v262 = vmul.f32 %v59, %v59
    %v263 = vmul.f32 %v60, %v60
    %v264 = vmul.f32 %v61, %v61
    %v265 = vmul.f32 %v62, %v62
    %v266 = vmul.f32 %v63, %v63
    %v267 = vmul.f32 %v64, %v64
    %v268 = vmul.f32 %v65, %v65
    %v269 = vmul.f32 %v66, %v66
    %v270 = vmul.f32 %v67, %v67
    %v271 = vmul.f32 %v68, %v68
    %v272 = vmul.f32 %v69, %v69
    %v273 = vmul.f32 %v70, %v70
    %v274 = vmul.f32 %v71, %v71
    %v275 = vmul.f32 %v72, %v72
    %v276 = vmul.f32 %v73, %v73
    %v277 = vmul.f32 %v74, %v74
    %v278 = vmul.f32 %v75, %v75
    %v279 = vmul.f32 %v76, %v76
    %v280 = vmul.f32 %v77, %v77
    %v281 = vmul.f32 %v78, %v78
    %v282 = vmul.f32 %v79, %v79
    %v283 = vmul.f32 %v80, %v80
    %v284 = vmul.f32 %v81, %v81
    %v285 = vmul.f32 %v82, %v82
    %v286 = vmul.f32 %v83, %v83
    %v287 = vmul.f32 %v84, %v84
    %v288 = vmul.f32 %v85, %v85
    %v289 = vmul.f32 %v86, %v86
    %v290 = vmul.f32 %v87, %v87
    %v291 = vmul.f32 %v88, %v88
    %v292 = vsel %vm90, %v228, 0.0
    %v293 = vsel %vm90, %v229, 0.0
    %v294 = vadd.f32 %v292, %v293
    %v295 = vsel %vm90, %v230, 0.0
    %v296 = vadd.f32 %v294, %v295
    %v297 = vsel %vm90, %v231, 0.0
    %v298 = vadd.f32 %v296, %v297
    %v299 = vsel %vm90, %v232, 0.0
    %v300 = vadd.f32 %v298, %v299
    %v301 = vsel %vm90, %v233, 0.0
    %v302 = vadd.f32 %v300, %v301
    %v303 = vsel %vm90, %v234, 0.0
    %v304 = vadd.f32 %v302, %v303
    %v305 = vsel %vm90, %v235, 0.0
    %v306 = vadd.f32 %v304, %v305
    %v307 = vsel %vm90, %v236, 0.0
    %v308 = vadd.f32 %v306, %v307
    %v309 = vsel %vm90, %v237, 0.0
    %v310 = vadd.f32 %v308, %v309
    %v311 = vsel %vm90, %v238, 0.0
    %v312 = vadd.f32 %v310, %v311
    %v313 = vsel %vm90, %v239, 0.0
    %v314 = vadd.f32 %v312, %v313
    %v315 = vsel %vm90, %v240, 0.0
    %v316 = vadd.f32 %v314, %v315
    %v317 = vsel %vm90, %v241, 0.0
    %v318 = vadd.f32 %v316, %v317
    %v319 = vsel %vm90, %v242, 0.0
    %v320 = vadd.f32 %v318, %v319
    %v321 = vsel %vm90, %v243, 0.0
    %v322 = vadd.f32 %v320, %v321
    %v323 = vsel %vm90, %v244, 0.0
    %v324 = vadd.f32 %v322, %v323
    %v325 = vsel %vm90, %v245, 0.0
    %v326 = vadd.f32 %v324, %v325
    %v327 = vsel %vm90, %v246, 0.0
    %v328 = vadd.f32 %v326, %v327
    %v329 = vsel %vm90, %v247, 0.0
    %v330 = vadd.f32 %v328, %v329
    %v331 = vsel %vm90, %v248, 0.0
    %v332 = vadd.f32 %v330, %v331
    %v333 = vsel %vm90, %v249, 0.0
    %v334 = vadd.f32 %v332, %v333
    %v335 = vsel %vm90, %v250, 0.0
    %v336 = vadd.f32 %v334, %v335
    %v337 = vsel %vm90, %v251, 0.0
    %v338 = vadd.f32 %v336, %v337
    %v339 = vsel %vm90, %v252, 0.0
    %v340 = vadd.f32 %v338, %v339
    %v341 = vsel %vm90, %v253, 0.0
    %v342 = vadd.f32 %v340, %v341
    %v343 = vsel %vm90, %v254, 0.0
    %v344 = vadd.f32 %v342, %v343
    %v345 = vsel %vm90, %v255, 0.0
    %v346 = vadd.f32 %v344, %v345
    %v347 = vsel %vm90, %v256, 0.0
    %v348 = vadd.f32 %v346, %v347
    %v349 = vsel %vm90, %v257, 0.0
    %v350 = vadd.f32 %v348, %v349
    %v351 = vsel %vm90, %v258, 0.0
    %v352 = vadd.f32 %v350, %v351
    %v353 = vsel %vm90, %v259, 0.0
    %v354 = vadd.f32 %v352, %v353
    %v355 = vsel %vm90, %v260, 0.0
    %v356 = vadd.f32 %v354, %v355
    %v357 = vsel %vm90, %v261, 0.0
    %v358 = vadd.f32 %v356, %v357
    %v359 = vsel %vm90, %v262, 0.0
    %v360 = vadd.f32 %v358, %v359
    %v361 = vsel %vm90, %v263, 0.0
    %v362 = vadd.f32 %v360, %v361
    %v363 = vsel %vm90, %v264, 0.0
    %v364 = vadd.f32 %v362, %v363
    %v365 = vsel %vm90, %v265, 0.0
    %v366 = vadd.f32 %v364, %v365
    %v367 = vsel %vm90, %v266, 0.0
    %v368 = vadd.f32 %v366, %v367
    %v369 = vsel %vm90, %v267, 0.0
    %v370 = vadd.f32 %v368, %v369
    %v371 = vsel %vm90, %v268, 0.0
    %v372 = vadd.f32 %v370, %v371
    %v373 = vsel %vm90, %v269, 0.0
    %v374 = vadd.f32 %v372, %v373
    %v375 = vsel %vm90, %v270, 0.0
    %v376 = vadd.f32 %v374, %v375
    %v377 = vsel %vm90, %v271, 0.0
    %v378 = vadd.f32 %v376, %v377
    %v379 = vsel %vm90, %v272, 0.0
    %v380 = vadd.f32 %v378, %v379
    %v381 = vsel %vm90, %v273, 0.0
    %v382 = vadd.f32 %v380, %v381
    %v383 = vsel %vm90, %v274, 0.0
    %v384 = vadd.f32 %v382, %v383
    %v385 = vsel %vm90, %v275, 0.0
    %v386 = vadd.f32 %v384, %v385
    %v387 = vsel %vm90, %v276, 0.0
    %v388 = vadd.f32 %v386, %v387
    %v389 = vsel %vm90, %v277, 0.0
    %v390 = vadd.f32 %v388, %v389
    %v391 = vsel %vm90, %v278, 0.0
    %v392 = vadd.f32 %v390, %v391
    %v393 = vsel %vm90, %v279, 0.0
    %v394 = vadd.f32 %v392, %v393
    %v395 = vsel %vm90, %v280, 0.0
    %v396 = vadd.f32 %v394, %v395
    %v397 = vsel %vm90, %v281, 0.0
    %v398 = vadd.f32 %v396, %v397
    %v399 = vsel %vm90, %v282, 0.0
    %v400 = vadd.f32 %v398, %v399
    %v401 = vsel %vm90, %v283, 0.0
    %v402 = vadd.f32 %v400, %v401
    %v403 = vsel %vm90, %v284, 0.0
    %v404 = vadd.f32 %v402, %v403
    %v405 = vsel %vm90, %v285, 0.0
    %v406 = vadd.f32 %v404, %v405
    %v407 = vsel %vm90, %v286, 0.0
    %v408 = vadd.f32 %v406, %v407
    %v409 = vsel %vm90, %v287, 0.0
    %v410 = vadd.f32 %v408, %v409
    %v411 = vsel %vm90, %v288, 0.0
    %v412 = vadd.f32 %v410, %v411
    %v413 = vsel %vm90, %v289, 0.0
    %v414 = vadd.f32 %v412, %v413
    %v415 = vsel %vm90, %v290, 0.0
    %v416 = vadd.f32 %v414, %v415
    %v417 = vsel %vm90, %v291, 0.0
    %v418 = vadd.f32 %v416, %v417
    %v419 = vrot.slane %v418, 4
    %v420 = vadd.f32 %v418, %v419
    %v421 = vrot.slane %v420, 2
    %v422 = vadd.f32 %v420, %v421
    %v423 = vrot.slane %v422, 1
    %v424 = vadd.f32 %v422, %v423
    %v425 = vadd.f32 %v227, %v424
    %426 = vst.msk [vmem:[#allocation3] sm:$0x1] %vm225, %v425
    // Predicated region
    $region18: #{tpu_custom_call.1} parent=1 // pred_check
      %p427 = pneg %p18
    $region19: #{tpu_custom_call.1} parent=1 // pred_check_branch
      %429 = sbr.rel (%p427) target = $region21
    $region20: #{tpu_custom_call.1} parent=1 // pred_region
      %v430 = vld [vmem:[#allocation2] sm:$0x1]
      %v431 = vmul.f32 %v430, 0.001953125
      %v432 = vld [vmem:[#allocation3] sm:$0x1]
      %v433 = vmul.f32 %v432, 0.001953125
      %v434 = vmul.f32 %v431, %v431
      %v435 = vsub.f32 %v433, %v434
      %v436 = vmax.f32 %v435, 0.0
      %v437 = vld [vmem:[%s1] sm:$0x1]
      %v438 = vadd.f32 %v436, 1e-05
      %v439 = vrsqrt.pop %v438
      %v440 = vmul.f32 %v439, %v438
      %v441 = vmul.f32 %v440, %v439
      %v442 = vmul.f32 0.5, %v441
      %v443 = vsub.f32 1.5, %v442
      %v444 = vmul.f32 %v439, %v443
      %vm445 = vweird.f32 %v438
      %vm446 = vweird.f32 %v439
      %vm447 = vmor %vm445, %vm446
      %v448 = vsel %vm447, %v439, %v444
      %v449 = vmul.f32 %v437, %v448
      %450 = vst.msk [vmem:[#allocation4] sm:$0x1] %vm225, %v449
      %v451 = vld [vmem:[%s2] sm:$0x1]
      %v452 = vmul.f32 %v431, %v449
      %v453 = vsub.f32 %v451, %v452
      %454 = vst.msk [vmem:[#allocation6] sm:$0x1] %vm225, %v453
    $region21: #{tpu_custom_call.1} parent=1 // pred_fallthru
      _
    // Predicated region
    $region22: #{tpu_custom_call.1} parent=1 // pred_check
      _
    $region23: #{tpu_custom_call.1} parent=1 // pred_check_branch
      %456 = sbr.rel (0) target = $region25
    $region24: #{tpu_custom_call.1} parent=1 // pred_region
      %458 = vsyncadd [#allocation5], 0
      %s460 = sshll.u32 [#allocation4], 4
      %s461 = int_to_ptr.vmem [resolvable:$true] %s460
      %s462 = sshll.u32 %s3, 4
      %s463 = int_to_ptr.hbm [resolvable:$true] %s462
      %465 = dma.vmem_to_hbm [thread:$0]  %s461, 16, %s463, [#allocation5]
    $region25: #{tpu_custom_call.1} parent=1 // pred_fallthru
      _
    // Predicated region
    $region26: #{tpu_custom_call.1} parent=1 // pred_check
      _
    $region27: #{tpu_custom_call.1} parent=1 // pred_check_branch
      %467 = sbr.rel (0) target = $region29
    $region28: #{tpu_custom_call.1} parent=1 // pred_region
      %469 = vsyncadd [#allocation7], 0
      %s471 = sshll.u32 [#allocation6], 4
      %s472 = int_to_ptr.vmem [resolvable:$true] %s471
      %s473 = sshll.u32 %s4, 4
      %s474 = int_to_ptr.hbm [resolvable:$true] %s473
      %476 = dma.vmem_to_hbm [thread:$0]  %s472, 16, %s474, [#allocation7]
    $region29: #{tpu_custom_call.1} parent=1 // pred_fallthru
      _
    // Predicated region
    $region30: #{tpu_custom_call.1} parent=1 // pred_check
      _
    $region31: #{tpu_custom_call.1} parent=1 // pred_check_branch
      %478 = sbr.rel (0) target = $region33
    $region32: #{tpu_custom_call.1} parent=1 // pred_region
      %480 = dma.done [#allocation5], 16
    $region33: #{tpu_custom_call.1} parent=1 // pred_fallthru
      _
    // Predicated region
    $region34: #{tpu_custom_call.1} parent=1 // pred_check
      _
    $region35: #{tpu_custom_call.1} parent=1 // pred_check_branch
      %482 = sbr.rel (0) target = $region37
    $region36: #{tpu_custom_call.1} parent=1 // pred_region
      %484 = dma.done [#allocation7], 16
    $region37: #{tpu_custom_call.1} parent=1 // pred_fallthru
      _
    %485 = vsyncpa [#allocation5], 1
    %486 = vsyncpa [#allocation7], 1

</llo_original>
